<compile_context>
chip_gen: v5e
topology: v5e:2x2
jax: 0.10.0
libtpu: 0.0.40
codegen_flags: <defaults>
</compile_context>

<pallas_src>
import functools

import jax
import jax.numpy as jnp
from jax.experimental import pallas as pl
from jax.experimental.pallas import tpu as pltpu

_MIB = 1024 * 1024


def _round_up(x, m):
    return (x + m - 1) // m * m


def _vmem_capacity_bytes():
    """Physical per-core VMEM (v5e/v6e: 128 MiB, v7x: 64 MiB); conservative fallback."""
    try:
        return int(pltpu.get_tpu_info().vmem_capacity_bytes)
    except Exception:  # off-TPU / older jax: assume the smallest (v7x) VMEM
        return 64 * _MIB


def _tb_candidates(B):
    """Batch-tile candidates, largest first.  Keeps nb >= 2 whenever B > 8 so the
    'parallel' batch grid axis can be sharded across both v7x TensorCores."""
    b8 = _round_up(B, 8)
    if b8 <= 8:
        return [b8]
    half = _round_up((B + 1) // 2, 8)           # ceil(B/2), sublane-aligned
    cands = [t for t in (512, 256, 128) if t <= half]
    cands.append(min(half, 256))                # mid-size fallback, still nb >= 2
    out = []
    for t in cands:
        if t not in out:
            out.append(t)
    return out


def residual_block_kernel(x_ref, w1_ref, b1_ref, w2_ref, b2_ref, o_ref,
                          acc_ref, *xc_scratch, cast_x, compute_dtype):
    k = pl.program_id(1)

    @pl.when(k == 0)
    def _():
        acc_ref[...] = jnp.zeros_like(acc_ref)
        if cast_x:
            # Hoist the f32 -> compute_dtype cast of the (k-resident) x tile out of the
            # k loop: cast once at k == 0, reuse for every weight panel.
            xc_scratch[0][...] = x_ref[...].astype(compute_dtype)

    xc = xc_scratch[0][...] if cast_x else x_ref[...].astype(compute_dtype)
    w1 = w1_ref[...]                         # (Hp, tk) compute dtype
    w2 = w2_ref[...]                         # (tk, Hp) compute dtype

    # linear1 panel + bias + ReLU (bias/ReLU on the VPU in f32).
    h = jnp.dot(xc, w1, preferred_element_type=jnp.float32)          # (tb, tk) f32
    h = jnp.maximum(h + b1_ref[...], 0.0)

    # linear2 panel, f32 accumulation.  Exact: each hidden unit lives in exactly one
    # tk panel, so the per-panel ReLU decomposition is exact.
    acc_ref[...] += jnp.dot(h.astype(compute_dtype), w2,
                            preferred_element_type=jnp.float32)      # (tb, Hp)

    @pl.when(k == pl.num_programs(1) - 1)
    def _():
        out = acc_ref[...] + b2_ref[...] + x_ref[...]                 # residual in f32
        o_ref[...] = jnp.maximum(out, 0.0).astype(o_ref.dtype)


@functools.partial(jax.jit, static_argnames=("tb", "tk", "compute_dtype"))
def residual_block(x, w1, b1, w2, b2, *, tb=None, tk=None,
                   compute_dtype=jnp.bfloat16):
    """x: (B, H) f32; w*: (H, H) stored (in, out); b*: (H,).  Returns (B, H) f32."""
    B, H = x.shape
    Hp = _round_up(H, 128)                        # lane-dense hidden dim
    wbytes = jnp.dtype(compute_dtype).itemsize

    vmem_cap = _vmem_capacity_bytes()
    vmem_budget = vmem_cap - 16 * _MIB            # headroom for Mosaic internal scratch
    want_cast_scratch = jnp.dtype(compute_dtype) != jnp.dtype(jnp.float32)

    def residency(tb_, tk_):
        return (2 * 2 * Hp * tk_ * wbytes         # w1 + w2 panels, double-buffered
                + 2 * 2 * tb_ * Hp * 4            # x-in + out f32 tiles, 2 bufs each
                + tb_ * Hp * 4                    # f32 accumulator scratch
                + (tb_ * Hp * wbytes if want_cast_scratch else 0)   # casted-x scratch
                + 2 * 2 * (tk_ + Hp) * 4)         # biases (tiny)

    if tb is None or tk is None:
        tbs = _tb_candidates(B) if tb is None else [tb]
        picked = None
        # 1) Weight-resident path (tk == Hp): weight block indices are constant across
        #    the whole grid, so W1/W2 are DMA'd from HBM exactly once.
        if tk is None:
            for tb_ in tbs:
                if residency(tb_, Hp) <= vmem_budget:
                    picked = (tb_, Hp)
                    break
        # 2) Streamed weight panels: largest tb for weight reuse, then largest tk.
        if picked is None:
            tks = ([t for t in (2048, 1024, 512, 256, 128)
                    if Hp % t == 0 and t <= Hp] if tk is None else [tk])
            for tb_ in tbs:
                for tk_ in tks:
                    if residency(tb_, tk_) <= vmem_budget:
                        picked = (tb_, tk_)
                        break
                if picked is not None:
                    break
            if picked is None:                    # last resort: smallest tiles
                picked = (tbs[-1], tks[-1])
        tb, tk = picked

    Bp = _round_up(B, tb)
    nb, nk = Bp // tb, Hp // tk
    cast_x = want_cast_scratch and nk > 1         # hoisted cast only pays off for nk > 1

    # Zero-pad.  Hidden padding is exact; padded batch rows are garbage and sliced off.
    xp = jnp.pad(x.astype(jnp.float32), ((0, Bp - B), (0, Hp - H)))
    w1p = jnp.pad(w1, ((0, Hp - H), (0, Hp - H))).astype(compute_dtype)
    w2p = jnp.pad(w2, ((0, Hp - H), (0, Hp - H))).astype(compute_dtype)
    b1p = jnp.pad(b1, (0, Hp - H)).reshape(1, Hp).astype(jnp.float32)
    b2p = jnp.pad(b2, (0, Hp - H)).reshape(1, Hp).astype(jnp.float32)

    vmem_need = residency(tb, tk)
    vmem_limit = int(min(vmem_cap - 8 * _MIB,                     # never exceed physical
                         max(32 * _MIB, int(vmem_need * 1.25) + 4 * _MIB)))

    # HBM traffic: weights re-read nb times only in the streamed path; once if resident.
    weight_hbm = (1 if nk == 1 else nb) * 2 * Hp * Hp * wbytes
    cost = pl.CostEstimate(
        flops=4 * Bp * Hp * Hp,                   # two (Bp x Hp x Hp) matmuls
        transcendentals=0,
        bytes_accessed=int(weight_hbm + 2 * Bp * Hp * 4 + 2 * Hp * 4),
    )

    kernel = functools.partial(residual_block_kernel,
                               cast_x=cast_x, compute_dtype=compute_dtype)
    scratch = [pltpu.VMEM((tb, Hp), jnp.float32)]
    if cast_x:
        scratch.append(pltpu.VMEM((tb, Hp), compute_dtype))

    out = pl.pallas_call(
        kernel,
        out_shape=jax.ShapeDtypeStruct((Bp, Hp), jnp.float32),
        grid_spec=pltpu.PrefetchScalarGridSpec(
            num_scalar_prefetch=0,
            grid=(nb, nk),
            in_specs=[
                pl.BlockSpec((tb, Hp), lambda i, k: (i, 0)),   # x tile, resident over k
                pl.BlockSpec((Hp, tk), lambda i, k: (0, k)),   # w1 column panel
                pl.BlockSpec((1, tk), lambda i, k: (0, k)),    # b1 panel
                pl.BlockSpec((tk, Hp), lambda i, k: (k, 0)),   # w2 row panel
                pl.BlockSpec((1, Hp), lambda i, k: (0, 0)),    # b2 (constant)
            ],
            out_specs=pl.BlockSpec((tb, Hp), lambda i, k: (i, 0)),
            scratch_shapes=scratch,
        ),
        compiler_params=pltpu.CompilerParams(
            dimension_semantics=("parallel", "arbitrary"),
            vmem_limit_bytes=vmem_limit,
        ),
        cost_estimate=cost,
    )(xp, w1p, b1p, w2p, b2p)

    return out[:B, :H]


# ----------------------------- references / demo ------------------------------------

def residual_block_ref(x, w1, b1, w2, b2):
    h = jnp.maximum(x @ w1 + b1, 0.0)
    out = h @ w2 + b2
    return jnp.maximum(out + x, 0.0)


def residual_block_ref_bf16(x, w1, b1, w2, b2):
    """Mirrors the kernel's bf16-MXU / f32-accumulate dtype path."""
    h = jnp.dot(x.astype(jnp.bfloat16), w1.astype(jnp.bfloat16),
                preferred_element_type=jnp.float32) + b1
    h = jnp.maximum(h, 0.0)
    out = jnp.dot(h.astype(jnp.bfloat16), w2.astype(jnp.bfloat16),
                  preferred_element_type=jnp.float32) + b2
    return jnp.maximum(out + x, 0.0)


def init_params(key, hidden_dim):
    """Deterministic init mimicking nn.Linear's uniform(-1/sqrt(fan_in), +)."""
    k1, k2, k3, k4 = jax.random.split(key, 4)
    bound = 1.0 / jnp.sqrt(hidden_dim)
    # Stored as (in, out) == transpose of PyTorch's (out, in) weight.
    w1 = jax.random.uniform(k1, (hidden_dim, hidden_dim), jnp.float32, -bound, bound)
    b1 = jax.random.uniform(k2, (hidden_dim,), jnp.float32, -bound, bound)
    w2 = jax.random.uniform(k3, (hidden_dim, hidden_dim), jnp.float32, -bound, bound)
    b2 = jax.random.uniform(k4, (hidden_dim,), jnp.float32, -bound, bound)
    return w1, b1, w2, b2


if __name__ == "__main__":
    key = jax.random.PRNGKey(0)
    kx, kp = jax.random.split(key)

    batch, hidden = 8, 32
    x = jax.random.normal(kx, (batch, hidden), jnp.float32)
    w1, b1, w2, b2 = init_params(kp, hidden)

    # Default path: bf16 on the MXU, f32 accumulate / bias / ReLU / residual.
    out_bf16 = jax.block_until_ready(residual_block(x, w1, b1, w2, b2))
    ref_bf16 = residual_block_ref_bf16(x, w1, b1, w2, b2)
    assert out_bf16.shape == (batch, hidden)
    assert jnp.allclose(out_bf16, ref_bf16, atol=1e-2, rtol=1e-2)

    # Full-f32 path against the exact reference.
    out_f32 = jax.block_until_ready(
        residual_block(x, w1, b1, w2, b2, compute_dtype=jnp.float32))
    ref_f32 = residual_block_ref(x, w1, b1, w2, b2)
    assert out_f32.shape == (batch, hidden)
    assert jnp.allclose(out_f32, ref_f32, atol=1e-4, rtol=1e-4)

    print("KERNEL_OK")
</pallas_src>

<mosaic_0001>
module attributes {stable_mosaic.version = 11 : i64} {
  func.func @residual_block_kernel(%arg0: i32, %arg1: i32, %arg2: memref<8x128xf32, #tpu.memory_space<vmem>>, %arg3: memref<128x128xbf16, #tpu.memory_space<vmem>>, %arg4: memref<1x128xf32, #tpu.memory_space<vmem>>, %arg5: memref<128x128xbf16, #tpu.memory_space<vmem>>, %arg6: memref<1x128xf32, #tpu.memory_space<vmem>>, %arg7: memref<8x128xf32, #tpu.memory_space<vmem>>, %arg8: memref<8x128xf32, #tpu.memory_space<vmem>>) attributes {dimension_semantics = [#tpu.dimension_semantics<parallel>, #tpu.dimension_semantics<arbitrary>], iteration_bounds = array<i64: 1, 1>, scalar_prefetch = 0 : i64, scratch_operands = 1 : i64, tpu.core_type = #tpu.core_type<tc>, window_params = [{transform_indices = @transform_0, window_bounds = array<i64: 8, 128>}, {transform_indices = @transform_1, window_bounds = array<i64: 128, 128>}, {transform_indices = @transform_2, window_bounds = array<i64: 1, 128>}, {transform_indices = @transform_3, window_bounds = array<i64: 128, 128>}, {pipeline_mode = #tpu.pipeline_mode<synchronous>, transform_indices = @transform_4, window_bounds = array<i64: 1, 128>}, {transform_indices = @transform_5, window_bounds = array<i64: 8, 128>}]} {
    %c0_i32 = arith.constant 0 : i32
    %0 = arith.cmpi eq, %arg1, %c0_i32 : i32
    %1 = arith.extui %0 : i1 to i32
    %c0_i32_0 = arith.constant 0 : i32
    %2 = arith.cmpi ne, %1, %c0_i32_0 : i32
    scf.if %2 {
      %cst_16 = arith.constant 0.000000e+00 : f32
      %21 = vector.broadcast %cst_16 : f32 to vector<8x128xf32>
      %c0_17 = arith.constant 0 : index
      %c0_18 = arith.constant 0 : index
      %22 = vector.load %arg8[%c0_17, %c0_18] : memref<8x128xf32, #tpu.memory_space<vmem>>, vector<8x128xf32>
      tpu.vector_store %arg8[%c0_17, %c0_18], %21 {strides = array<i32>} : memref<8x128xf32, #tpu.memory_space<vmem>>, vector<8x128xf32>,
    } else {
    }
    %c0 = arith.constant 0 : index
    %c0_1 = arith.constant 0 : index
    %3 = vector.load %arg2[%c0, %c0_1] : memref<8x128xf32, #tpu.memory_space<vmem>>, vector<8x128xf32>
    %4 = arith.truncf %3 : vector<8x128xf32> to vector<8x128xbf16>
    %c0_2 = arith.constant 0 : index
    %c0_3 = arith.constant 0 : index
    %5 = vector.load %arg3[%c0_2, %c0_3] : memref<128x128xbf16, #tpu.memory_space<vmem>>, vector<128x128xbf16>
    %c0_4 = arith.constant 0 : index
    %c0_5 = arith.constant 0 : index
    %6 = vector.load %arg5[%c0_4, %c0_5] : memref<128x128xbf16, #tpu.memory_space<vmem>>, vector<128x128xbf16>
    %cst = arith.constant dense<0.000000e+00> : vector<8x128xf32>
    %7 = tpu.matmul %4, %5, %cst {dimension_numbers = #tpu.dot_dimension_numbers<[1], [0], [0], [1], [0, 0, 1, 1], [], []>} : vector<8x128xbf16>, vector<128x128xbf16>, vector<8x128xf32> -> vector<8x128xf32>
    %c0_6 = arith.constant 0 : index
    %c0_7 = arith.constant 0 : index
    %8 = vector.load %arg4[%c0_6, %c0_7] : memref<1x128xf32, #tpu.memory_space<vmem>>, vector<1x128xf32>
    %9 = vector.broadcast %8 : vector<1x128xf32> to vector<8x128xf32>
    %10 = arith.addf %7, %9 : vector<8x128xf32>
    %cst_8 = arith.constant 0.000000e+00 : f32
    %11 = vector.broadcast %cst_8 : f32 to vector<8x128xf32>
    %12 = arith.maximumf %10, %11 : vector<8x128xf32>
    %c0_9 = arith.constant 0 : index
    %c0_10 = arith.constant 0 : index
    %13 = vector.load %arg8[%c0_9, %c0_10] : memref<8x128xf32, #tpu.memory_space<vmem>>, vector<8x128xf32>
    %14 = arith.truncf %12 : vector<8x128xf32> to vector<8x128xbf16>
    %cst_11 = arith.constant dense<0.000000e+00> : vector<8x128xf32>
    %15 = tpu.matmul %14, %6, %cst_11 {dimension_numbers = #tpu.dot_dimension_numbers<[1], [0], [0], [1], [0, 0, 1, 1], [], []>} : vector<8x128xbf16>, vector<128x128xbf16>, vector<8x128xf32> -> vector<8x128xf32>
    %16 = arith.addf %13, %15 : vector<8x128xf32>
    %c0_12 = arith.constant 0 : index
    %c0_13 = arith.constant 0 : index
    %17 = vector.load %arg8[%c0_12, %c0_13] : memref<8x128xf32, #tpu.memory_space<vmem>>, vector<8x128xf32>
    tpu.vector_store %arg8[%c0_12, %c0_13], %16 {strides = array<i32>} : memref<8x128xf32, #tpu.memory_space<vmem>>, vector<8x128xf32>,
    %c0_i32_14 = arith.constant 0 : i32
    %18 = arith.cmpi eq, %arg1, %c0_i32_14 : i32
    %19 = arith.extui %18 : i1 to i32
    %c0_i32_15 = arith.constant 0 : i32
    %20 = arith.cmpi ne, %19, %c0_i32_15 : i32
    scf.if %20 {
      %c0_16 = arith.constant 0 : index
      %c0_17 = arith.constant 0 : index
      %21 = vector.load %arg8[%c0_16, %c0_17] : memref<8x128xf32, #tpu.memory_space<vmem>>, vector<8x128xf32>
      %c0_18 = arith.constant 0 : index
      %c0_19 = arith.constant 0 : index
      %22 = vector.load %arg6[%c0_18, %c0_19] : memref<1x128xf32, #tpu.memory_space<vmem>>, vector<1x128xf32>
      %23 = vector.broadcast %22 : vector<1x128xf32> to vector<8x128xf32>
      %24 = arith.addf %21, %23 : vector<8x128xf32>
      %c0_20 = arith.constant 0 : index
      %c0_21 = arith.constant 0 : index
      %25 = vector.load %arg2[%c0_20, %c0_21] : memref<8x128xf32, #tpu.memory_space<vmem>>, vector<8x128xf32>
      %26 = arith.addf %24, %25 : vector<8x128xf32>
      %cst_22 = arith.constant 0.000000e+00 : f32
      %27 = vector.broadcast %cst_22 : f32 to vector<8x128xf32>
      %28 = arith.maximumf %26, %27 : vector<8x128xf32>
      %c0_23 = arith.constant 0 : index
      %c0_24 = arith.constant 0 : index
      %29 = vector.load %arg7[%c0_23, %c0_24] : memref<8x128xf32, #tpu.memory_space<vmem>>, vector<8x128xf32>
      tpu.vector_store %arg7[%c0_23, %c0_24], %28 {strides = array<i32>} : memref<8x128xf32, #tpu.memory_space<vmem>>, vector<8x128xf32>,
    } else {
    }
    return
  }
  func.func @transform_0(%arg0: i32, %arg1: i32) -> (i32, i32) {
    %c0_i32 = arith.constant 0 : i32
    %c0_i32_0 = arith.constant 0 : i32
    return %arg0, %c0_i32 : i32, i32
  }
  func.func @transform_1(%arg0: i32, %arg1: i32) -> (i32, i32) {
    %c0_i32 = arith.constant 0 : i32
    %c0_i32_0 = arith.constant 0 : i32
    return %c0_i32, %arg1 : i32, i32
  }
  func.func @transform_2(%arg0: i32, %arg1: i32) -> (i32, i32) {
    %c0_i32 = arith.constant 0 : i32
    %c0_i32_0 = arith.constant 0 : i32
    return %c0_i32, %arg1 : i32, i32
  }
  func.func @transform_3(%arg0: i32, %arg1: i32) -> (i32, i32) {
    %c0_i32 = arith.constant 0 : i32
    %c0_i32_0 = arith.constant 0 : i32
    return %arg1, %c0_i32 : i32, i32
  }
  func.func @transform_4(%arg0: i32, %arg1: i32) -> (i32, i32) {
    %c0_i32 = arith.constant 0 : i32
    %c0_i32_0 = arith.constant 0 : i32
    %c0_i32_1 = arith.constant 0 : i32
    return %c0_i32, %c0_i32_0 : i32, i32
  }
  func.func @transform_5(%arg0: i32, %arg1: i32) -> (i32, i32) {
    %c0_i32 = arith.constant 0 : i32
    %c0_i32_0 = arith.constant 0 : i32
    return %arg0, %c0_i32 : i32, i32
  }
}

</mosaic_0001>

<llo_original>
// kernel: residual_block.1
$region0: #{residual_block.1}
  #allocation0 [shape = 'u32[]', space=smem, size = 0x4, offset = 0x4, fixed_abs, tag = 'smem constant byte address 0x4 - core index']
  #allocation1 [shape = 'u32[72,128]{1,0:T(1,128)}', space=vmem, size = 0x9000, scoped, tag = 'internal scratch']
  #allocation2 [shape = 'f32[8,128]{1,0:T(8,128)}', space=vmem, size = 0x1000, scoped, tag = 'scratch operand']
  %s0 = inlined_call_operand.vmem [shape: f32[8,128], index: 0, kind: input, shape index: {}]
  %s1 = inlined_call_operand.vmem [shape: bf16[128,128], index: 1, kind: input, shape index: {}]
  %s2 = inlined_call_operand.vmem [shape: f32[1,128], index: 2, kind: input, shape index: {}]
  %s3 = inlined_call_operand.vmem [shape: bf16[128,128], index: 3, kind: input, shape index: {}]
  %s4 = inlined_call_operand.vmem [shape: f32[1,128], index: 4, kind: input, shape index: {}]
  %s5 = inlined_call_operand.hbm [shape: f32[8,128], index: 5, kind: output, shape index: {}]
  %s6 = sld [smem:[#allocation0]]
  $region38: #{residual_block.1} parent=0
    _
  %s8 = ssub.s32 1, %s6
  %s9 = scalar_select 0, %s8, %s6
  $region1: #{residual_block.1} parent=0
    #allocation3 [shape = 'u8[4096]{0}', space=vmem, size = 0x1000, scoped, tag = 'output window, operand 0, single buffered']
    #allocation4 [shape = 's32[1]{0}', space=sflag, size = 0x4, scoped, tag = 'scoped memory for residual_block.1']
    %10 = vsyncpa [#allocation4], 0
    // Predicated region
    $region2: #{residual_block.1} parent=1 // pred_check
      _
    $region3: #{residual_block.1} parent=1 // pred_check_branch
      %12 = sbr.rel (0) target = $region5
    $region4: #{residual_block.1} parent=1 // pred_region
      _
    $region5: #{residual_block.1} parent=1 // pred_fallthru
      _
    // Predicated region
    $region6: #{residual_block.1} parent=1 // pred_check
      _
    $region7: #{residual_block.1} parent=1 // pred_check_branch
      %14 = sbr.rel (0) target = $region9
    $region8: #{residual_block.1} parent=1 // pred_region
      _
    $region9: #{residual_block.1} parent=1 // pred_fallthru
      _
    // Predicated region
    $region10: #{residual_block.1} parent=1 // pred_check
      _
    $region11: #{residual_block.1} parent=1 // pred_check_branch
      %16 = sbr.rel (0) target = $region13
    $region12: #{residual_block.1} parent=1 // pred_region
      _
    $region13: #{residual_block.1} parent=1 // pred_fallthru
      _
    // Predicated region
    $region14: #{residual_block.1} parent=1 // pred_check
      _
    $region15: #{residual_block.1} parent=1 // pred_check_branch
      %18 = sbr.rel (0) target = $region17
    $region16: #{residual_block.1} parent=1 // pred_region
      _
    $region17: #{residual_block.1} parent=1 // pred_fallthru
      _
    // Predicated region
    $region18: #{residual_block.1} parent=1 // pred_check
      _
    $region19: #{residual_block.1} parent=1 // pred_check_branch
      %20 = sbr.rel (0) target = $region21
    $region20: #{residual_block.1} parent=1 // pred_region
      _
    $region21: #{residual_block.1} parent=1 // pred_fallthru
      _
    %p21 = scmp.eq.s32.totalorder 0, 0
    // Predicated region
    $region22: #{residual_block.1} parent=1 // pred_check
      %p22 = pneg %p21
    $region23: #{residual_block.1} parent=1 // pred_check_branch
      %24 = sbr.rel (%p22) target = $region25
    $region24: #{residual_block.1} parent=1 // pred_region
      %25 = vst [vmem:[#allocation2] sm:$0xff] 0.0
    $region25: #{residual_block.1} parent=1 // pred_fallthru
      _
    %v26 = vld [vmem:[%s0] sm:$0xff]
    %v27 = vpack.c.bf16 %v26, %v26
    %v28 = vld [vmem:[%s1] sm:$0xf]
    %v29 = vld [vmem:[%s1 + $0x4] sm:$0xf]
    %v30 = vld [vmem:[%s1 + $0x8] sm:$0xf]
    %v31 = vld [vmem:[%s1 + $0xc] sm:$0xf]
    %v32 = vld [vmem:[%s1 + $0x10] sm:$0xf]
    %v33 = vld [vmem:[%s1 + $0x14] sm:$0xf]
    %v34 = vld [vmem:[%s1 + $0x18] sm:$0xf]
    %v35 = vld [vmem:[%s1 + $0x1c] sm:$0xf]
    %v36 = vld [vmem:[%s1 + $0x20] sm:$0xf]
    %v37 = vld [vmem:[%s1 + $0x24] sm:$0xf]
    %v38 = vld [vmem:[%s1 + $0x28] sm:$0xf]
    %v39 = vld [vmem:[%s1 + $0x2c] sm:$0xf]
    %v40 = vld [vmem:[%s1 + $0x30] sm:$0xf]
    %v41 = vld [vmem:[%s1 + $0x34] sm:$0xf]
    %v42 = vld [vmem:[%s1 + $0x38] sm:$0xf]
    %v43 = vld [vmem:[%s1 + $0x3c] sm:$0xf]
    %v44 = vld [vmem:[%s3] sm:$0xf]
    %v45 = vld [vmem:[%s3 + $0x4] sm:$0xf]
    %v46 = vld [vmem:[%s3 + $0x8] sm:$0xf]
    %v47 = vld [vmem:[%s3 + $0xc] sm:$0xf]
    %v48 = vld [vmem:[%s3 + $0x10] sm:$0xf]
    %v49 = vld [vmem:[%s3 + $0x14] sm:$0xf]
    %v50 = vld [vmem:[%s3 + $0x18] sm:$0xf]
    %v51 = vld [vmem:[%s3 + $0x1c] sm:$0xf]
    %v52 = vld [vmem:[%s3 + $0x20] sm:$0xf]
    %v53 = vld [vmem:[%s3 + $0x24] sm:$0xf]
    %v54 = vld [vmem:[%s3 + $0x28] sm:$0xf]
    %v55 = vld [vmem:[%s3 + $0x2c] sm:$0xf]
    %v56 = vld [vmem:[%s3 + $0x30] sm:$0xf]
    %v57 = vld [vmem:[%s3 + $0x34] sm:$0xf]
    %v58 = vld [vmem:[%s3 + $0x38] sm:$0xf]
    %v59 = vld [vmem:[%s3 + $0x3c] sm:$0xf]
    %v60 = vld [vmem:[%s2] sm:$0x1]
    %v62 = vperm.slane %v60, 0
    %v80 = vunpack.c.l.b16 %v28
    %v81 = vunpack.c.l.b16 %v29
    %v82 = vunpack.c.l.b16 %v30
    %v83 = vunpack.c.l.b16 %v31
    %v84 = vunpack.c.l.b16 %v32
    %v85 = vunpack.c.l.b16 %v33
    %v86 = vunpack.c.l.b16 %v34
    %v87 = vunpack.c.l.b16 %v35
    %v88 = vunpack.c.l.b16 %v36
    %v89 = vunpack.c.l.b16 %v37
    %v90 = vunpack.c.l.b16 %v38
    %v91 = vunpack.c.l.b16 %v39
    %v92 = vunpack.c.l.b16 %v40
    %v93 = vunpack.c.l.b16 %v41
    %v94 = vunpack.c.l.b16 %v42
    %v95 = vunpack.c.l.b16 %v43
    %v96 = vpack.c.b16 %v81, %v80
    %v97 = vpack.c.b16 %v83, %v82
    %v98 = vpack.c.b16 %v85, %v84
    %v99 = vpack.c.b16 %v87, %v86
    %v100 = vpack.c.b16 %v89, %v88
    %v101 = vpack.c.b16 %v91, %v90
    %v102 = vpack.c.b16 %v93, %v92
    %v103 = vpack.c.b16 %v95, %v94
    %112 = vmatpush.bf16.msra.mxu0 %v103
    %113 = vmatpush.bf16.msra.mxu0 %v102
    %114 = vmatpush.bf16.msra.mxu0 %v101
    %115 = vmatpush.bf16.msra.mxu0 %v100
    %116 = vmatpush.bf16.msra.mxu0 %v99
    %117 = vmatpush.bf16.msra.mxu0 %v98
    %118 = vmatpush.bf16.msra.mxu0 %v97
    %119 = vmatpush.bf16.msra.mxu0 %v96
    %120 = vmatmul.bf16.gmra.mxu0 %v27
    %v121 = vpop.f32.mrf.mxu0
    %v122 = vadd.f32 %v62, %v121
    %v123 = vpop.f32.mrf.mxu0
    %124 = vdwg.mxu0
    %v125 = vmax.f32 %v122, 0.0
    %v126 = vld [vmem:[#allocation2] sm:$0xff]
    %v127 = vpack.c.bf16 %v125, %v125
    %v144 = vunpack.c.l.b16 %v44
    %v145 = vunpack.c.l.b16 %v45
    %v146 = vunpack.c.l.b16 %v46
    %v147 = vunpack.c.l.b16 %v47
    %v148 = vunpack.c.l.b16 %v48
    %v149 = vunpack.c.l.b16 %v49
    %v150 = vunpack.c.l.b16 %v50
    %v151 = vunpack.c.l.b16 %v51
    %v152 = vunpack.c.l.b16 %v52
    %v153 = vunpack.c.l.b16 %v53
    %v154 = vunpack.c.l.b16 %v54
    %v155 = vunpack.c.l.b16 %v55
    %v156 = vunpack.c.l.b16 %v56
    %v157 = vunpack.c.l.b16 %v57
    %v158 = vunpack.c.l.b16 %v58
    %v159 = vunpack.c.l.b16 %v59
    %v160 = vpack.c.b16 %v145, %v144
    %v161 = vpack.c.b16 %v147, %v146
    %v162 = vpack.c.b16 %v149, %v148
    %v163 = vpack.c.b16 %v151, %v150
    %v164 = vpack.c.b16 %v153, %v152
    %v165 = vpack.c.b16 %v155, %v154
    %v166 = vpack.c.b16 %v157, %v156
    %v167 = vpack.c.b16 %v159, %v158
    %176 = vmatpush.bf16.msra.mxu0 %v167
    %177 = vmatpush.bf16.msra.mxu0 %v166
    %178 = vmatpush.bf16.msra.mxu0 %v165
    %179 = vmatpush.bf16.msra.mxu0 %v164
    %180 = vmatpush.bf16.msra.mxu0 %v163
    %181 = vmatpush.bf16.msra.mxu0 %v162
    %182 = vmatpush.bf16.msra.mxu0 %v161
    %183 = vmatpush.bf16.msra.mxu0 %v160
    %184 = vmatmul.bf16.gmra.mxu0 %v127
    %v185 = vpop.f32.mrf.mxu0
    %v186 = vadd.f32 0.0, %v185
    %v187 = vpop.f32.mrf.mxu0
    %188 = vdwg.mxu0
    %v189 = vadd.f32 %v126, %v186
    %190 = vst [vmem:[#allocation2] sm:$0xff] %v189
    // Predicated region
    $region26: #{residual_block.1} parent=1 // pred_check
      %p191 = pneg %p21
    $region27: #{residual_block.1} parent=1 // pred_check_branch
      %193 = sbr.rel (%p191) target = $region29
    $region28: #{residual_block.1} parent=1 // pred_region
      %v194 = vld [vmem:[#allocation2] sm:$0xff]
      %v195 = vld [vmem:[%s4] sm:$0x1]
      %v197 = vperm.slane %v195, 0
      %v199 = vadd.f32 %v194, %v197
      %v200 = vld [vmem:[%s0] sm:$0xff]
      %v201 = vadd.f32 %v199, %v200
      %v202 = vmax.f32 %v201, 0.0
      %203 = vst [vmem:[#allocation3] sm:$0xff] %v202
    $region29: #{residual_block.1} parent=1 // pred_fallthru
      _
    // Predicated region
    $region30: #{residual_block.1} parent=1 // pred_check
      _
    $region31: #{residual_block.1} parent=1 // pred_check_branch
      %205 = sbr.rel (0) target = $region33
    $region32: #{residual_block.1} parent=1 // pred_region
      %207 = vsyncadd [#allocation4], 0
      %s209 = sshll.u32 [#allocation3], 4
      %s210 = int_to_ptr.vmem [resolvable:$true] %s209
      %s211 = sshll.u32 %s5, 4
      %s212 = int_to_ptr.hbm [resolvable:$true] %s211
      %214 = dma.vmem_to_hbm [thread:$0]  %s210, 128, %s212, [#allocation4]
    $region33: #{residual_block.1} parent=1 // pred_fallthru
      _
    // Predicated region
    $region34: #{residual_block.1} parent=1 // pred_check
      _
    $region35: #{residual_block.1} parent=1 // pred_check_branch
      %216 = sbr.rel (0) target = $region37
    $region36: #{residual_block.1} parent=1 // pred_region
      %218 = dma.done [#allocation4], 128
    $region37: #{residual_block.1} parent=1 // pred_fallthru
      _
    %219 = vsyncpa [#allocation4], 1

</llo_original>
